<compile_context>
chip_gen: v7x
topology: tpu7x:2x2x1
jax: 0.10.0
libtpu: 0.0.40
codegen_flags: <defaults>
</compile_context>

<pallas_src>
import functools
import math

import jax
import jax.numpy as jnp
from jax import lax
from jax.experimental import pallas as pl
from jax.experimental.pallas import tpu as pltpu


# ----------------------------- kernel ----------------------------------------

def _normalize_kernel(x_ref, o_ref, *, power, axis):
    """out = x * sum(x**power, axis)**(-1/power); f32 accumulation."""
    x = x_ref[...].astype(jnp.float32)
    if isinstance(power, int):
        xp = lax.integer_pow(x, power)      # exact, valid for negative x
    else:
        xp = x ** power                     # float pow (matches torch.pow)
    s = jnp.sum(xp, axis=axis, keepdims=True)
    if power == 2:
        inv = lax.rsqrt(s)                  # EUP rsqrt: no VPU divide
    else:
        inv = s ** (-1.0 / power)           # EUP pow on the thin (.,1,.) column
    o_ref[...] = (x * inv).astype(o_ref.dtype)


# ----------------------------- sizing helpers ---------------------------------

def _round_up(a, m):
    return (a + m - 1) // m * m


def _sublane_multiple(dtype):
    itemsize = jnp.dtype(dtype).itemsize
    return max(8, 32 // max(1, itemsize))   # 8 f32, 16 bf16, 32 int8/fp8


def _tpu_vmem_limit_bytes():
    # Generation-aware scoped-VMEM budget: 64 MiB on 128-MiB parts (v5e/v6e),
    # 48 MiB on v7x (64 MiB/TC physical).  Conservative default if query fails.
    phys = 64 << 20
    try:
        info = pltpu.get_tpu_info()
        phys = int(getattr(info, "vmem_capacity_bytes", phys))
    except Exception:
        pass
    return min(64 << 20, (phys * 3) // 4)


def _normalize_ref(x, power, axis):
    # Pure-JAX fallback (only used for pathologically wide reduction dims).
    if isinstance(power, int):
        s = jnp.sum(lax.integer_pow(x, power), axis=axis, keepdims=True)
    else:
        s = jnp.sum(x ** power, axis=axis, keepdims=True)
    return x / (s ** (1.0 / power))


# ----------------------------- pallas paths -----------------------------------

def _normalize_last(x2, power, vmem_limit, block_budget):
    """x2: (M, D), normalize over the last (lane) axis."""
    M, D = x2.shape
    itemsize = jnp.dtype(x2.dtype).itemsize
    sub = _sublane_multiple(x2.dtype)
    row_bytes = D * itemsize
    if sub * row_bytes > block_budget:
        # TODO(synk): add a two-pass D-tiled kernel (scratch accumulator +
        # pl.when finalize) for very wide feature dims; fall back for now.
        return _normalize_ref(x2, power, axis=-1)

    tm = block_budget // row_bytes
    tm = max(sub, (tm // sub) * sub)
    tm = min(tm, _round_up(M, sub))
    grid = (pl.cdiv(M, tm),)

    kernel = functools.partial(_normalize_kernel, power=power, axis=-1)
    return pl.pallas_call(
        kernel,
        out_shape=jax.ShapeDtypeStruct((M, D), x2.dtype),
        grid=grid,
        in_specs=[pl.BlockSpec((tm, D), lambda i: (i, 0))],
        out_specs=pl.BlockSpec((tm, D), lambda i: (i, 0)),
        compiler_params=pltpu.CompilerParams(
            dimension_semantics=("parallel",),
            vmem_limit_bytes=vmem_limit,
        ),
    )(x2)


def _normalize_mid(x3, power, vmem_limit, block_budget):
    """x3: (pre, D, post), normalize over the middle (sublane) axis."""
    P, D, Q = x3.shape
    itemsize = jnp.dtype(x3.dtype).itemsize
    col_bytes = D * itemsize                      # one full-D reduction column

    if Q * col_bytes <= block_budget:
        tq = Q                                    # full (lane-dense) trailing axis
        tp = max(1, block_budget // (Q * col_bytes))
        tp = min(tp, P)
    else:
        tp = 1
        tq = (block_budget // col_bytes) // 128 * 128
        if tq < 128:
            # TODO(synk): D too large to keep a full reduction column in VMEM;
            # needs a D-tiled two-pass kernel.  Fall back to plain JAX.
            return _normalize_ref(x3, power, axis=1)

    grid = (pl.cdiv(P, tp), pl.cdiv(Q, tq))
    kernel = functools.partial(_normalize_kernel, power=power, axis=1)
    return pl.pallas_call(
        kernel,
        out_shape=jax.ShapeDtypeStruct((P, D, Q), x3.dtype),
        grid=grid,
        in_specs=[pl.BlockSpec((tp, D, tq), lambda i, j: (i, 0, j))],
        out_specs=pl.BlockSpec((tp, D, tq), lambda i, j: (i, 0, j)),
        compiler_params=pltpu.CompilerParams(
            dimension_semantics=("parallel", "parallel"),
            vmem_limit_bytes=vmem_limit,
        ),
    )(x3)


# ----------------------------- wrapper ----------------------------------------

def normalize(x, dim=-1, power=2):
    """Pallas equivalent of Normalize(power).forward(x, dim)."""
    if isinstance(power, float) and power.is_integer():
        power = int(power)                        # keep lax.integer_pow lowering

    ndim = x.ndim
    dim = dim % ndim
    shp = x.shape
    D = shp[dim]
    pre = math.prod(shp[:dim])
    post = math.prod(shp[dim + 1:])

    vmem_limit = _tpu_vmem_limit_bytes()
    block_budget = vmem_limit // 6                # 2x(in+out) buffers + headroom

    if post == 1:
        # dim is the last (or last non-trivial) axis: lane-axis reduction.
        out = _normalize_last(x.reshape(pre * 1, D).reshape(pre, D),
                              power, vmem_limit, block_budget)
    else:
        # dim in the middle: keep the trailing axis lane-dense, reduce over
        # sublanes in-kernel (no HBM transposes).
        out = _normalize_mid(x.reshape(pre, D, post),
                             power, vmem_limit, block_budget)
    return out.reshape(shp)


# ----------------------------- demo / check ----------------------------------

if __name__ == "__main__":
    key = jax.random.PRNGKey(0)
    # batch=2, seq=8, hidden=128 (lane-dense feature dim)
    x = jax.random.normal(key, (2, 8, 128), jnp.float32)

    # 1) L2 normalize over the last dim (fast rsqrt path).
    fn = jax.jit(lambda t: normalize(t, dim=-1, power=2))
    out = fn(x)
    jax.block_until_ready(out)
    ref = x / (jnp.sum(x ** 2, axis=-1, keepdims=True) ** 0.5)
    assert out.shape == x.shape
    assert jnp.allclose(out, ref, atol=1e-5, rtol=1e-5)
    assert jnp.allclose(jnp.sum(out * out, axis=-1), 1.0, atol=1e-4)

    # 2) Normalize over a middle dim (sublane reduction, no moveaxis/transpose).
    out1 = jax.jit(lambda t: normalize(t, dim=1, power=2))(x)
    jax.block_until_ready(out1)
    ref1 = x / (jnp.sum(x ** 2, axis=1, keepdims=True) ** 0.5)
    assert jnp.allclose(out1, ref1, atol=1e-5, rtol=1e-5)

    # 3) Generic Lp path (power=3) on positive data (inverse-power multiply).
    xp = jnp.abs(x) + 0.1
    out3 = jax.jit(lambda t: normalize(t, dim=-1, power=3))(xp)
    jax.block_until_ready(out3)
    ref3 = xp / (jnp.sum(xp ** 3, axis=-1, keepdims=True) ** (1.0 / 3.0))
    assert jnp.allclose(out3, ref3, atol=1e-4, rtol=1e-4)

    print("KERNEL_OK")
</pallas_src>

<mosaic_0001>
module attributes {stable_mosaic.version = 11 : i64} {
  func.func @_normalize_kernel(%arg0: i32, %arg1: memref<16x128xf32, #tpu.memory_space<vmem>>, %arg2: memref<16x128xf32, #tpu.memory_space<vmem>>) attributes {dimension_semantics = [#tpu.dimension_semantics<parallel>], iteration_bounds = array<i64: 1>, scalar_prefetch = 0 : i64, scratch_operands = 0 : i64, tpu.core_type = #tpu.core_type<tc>, window_params = [{transform_indices = @transform_0, window_bounds = array<i64: 16, 128>}, {transform_indices = @transform_1, window_bounds = array<i64: 16, 128>}]} {
    %c0 = arith.constant 0 : index
    %c0_0 = arith.constant 0 : index
    %0 = vector.load %arg1[%c0, %c0_0] : memref<16x128xf32, #tpu.memory_space<vmem>>, vector<16x128xf32>
    %1 = arith.mulf %0, %0 : vector<16x128xf32>
    %cst = arith.constant dense<0.000000e+00> : vector<16xf32>
    %2 = vector.multi_reduction <add>, %1, %cst [1] : vector<16x128xf32> to vector<16xf32>
    %3 = vector.shape_cast %2 : vector<16xf32> to vector<16x1xf32>
    %4 = math.rsqrt %3 : vector<16x1xf32>
    %5 = vector.broadcast %4 : vector<16x1xf32> to vector<16x128xf32>
    %6 = arith.mulf %0, %5 : vector<16x128xf32>
    %c0_1 = arith.constant 0 : index
    %c0_2 = arith.constant 0 : index
    %7 = vector.load %arg2[%c0_1, %c0_2] : memref<16x128xf32, #tpu.memory_space<vmem>>, vector<16x128xf32>
    tpu.vector_store %arg2[%c0_1, %c0_2], %6 {strides = array<i32>} : memref<16x128xf32, #tpu.memory_space<vmem>>, vector<16x128xf32>,
    return
  }
  func.func @transform_0(%arg0: i32) -> (i32, i32) {
    %c0_i32 = arith.constant 0 : i32
    %c0_i32_0 = arith.constant 0 : i32
    return %arg0, %c0_i32 : i32, i32
  }
  func.func @transform_1(%arg0: i32) -> (i32, i32) {
    %c0_i32 = arith.constant 0 : i32
    %c0_i32_0 = arith.constant 0 : i32
    return %arg0, %c0_i32 : i32, i32
  }
}

</mosaic_0001>

<llo_original>
// kernel: _lambda_.1
$region0: #{_lambda_.1}
  #allocation0 [shape = 'u32[]', space=smem, size = 0x4, offset = 0x4, fixed_abs, tag = 'smem constant byte address 0x4 - core index']
  #allocation1 [shape = 'u32[144,128]{1,0:T(1,128)}', space=vmem, size = 0x12000, scoped, tag = 'internal scratch']
  %s0 = inlined_call_operand.hbm [shape: f32[16,128], index: 0, kind: input, shape index: {}]
  %s1 = inlined_call_operand.hbm [shape: f32[16,128], index: 1, kind: output, shape index: {}]
  %s2 = sld [smem:[#allocation0]]
  $region18: #{_lambda_.1} parent=0
    _
  %s4 = ssub.s32 1, %s2
  %s5 = scalar_select 0, %s4, %s2
  $region1: #{_lambda_.1} parent=0
    #allocation2 [shape = 'u8[8192]{0}', space=vmem, size = 0x2000, scoped, tag = 'input window, operand 0, single buffered']
    #allocation3 [shape = 's32[1]{0}', space=sflag, size = 0x4, scoped, tag = 'scoped memory for _lambda_.1']
    #allocation4 [shape = 's32[1]{0}', space=sflag, size = 0x4, scoped, tag = 'scoped memory for _lambda_.1']
    #allocation5 [shape = 'u8[8192]{0}', space=vmem, size = 0x2000, scoped, tag = 'output window, operand 0, single buffered']
    %6 = vsyncpa [#allocation3], 0
    %7 = vsyncpa [#allocation4], 0
    // Predicated region
    $region2: #{_lambda_.1} parent=1 // pred_check
      _
    $region3: #{_lambda_.1} parent=1 // pred_check_branch
      %9 = sbr.rel (0) target = $region5
    $region4: #{_lambda_.1} parent=1 // pred_region
      %s11 = ssub.s32 256, 256
      %12 = vsyncadd [#allocation3], %s11
      %s13 = sshll.u32 [#allocation2], 4
      %s14 = int_to_ptr.vmem [resolvable:$true] %s13
      %19 = dma.hbm_to_vmem [thread:$0]  %s0, 256, %s14, [#allocation3], 128, 128, 8
    $region5: #{_lambda_.1} parent=1 // pred_fallthru
      _
    // Predicated region
    $region6: #{_lambda_.1} parent=1 // pred_check
      _
    $region7: #{_lambda_.1} parent=1 // pred_check_branch
      %21 = sbr.rel (0) target = $region9
    $region8: #{_lambda_.1} parent=1 // pred_region
      %22 = dma.done [#allocation3], 256
    $region9: #{_lambda_.1} parent=1 // pred_fallthru
      _
    %v23 = vld [vmem:[#allocation2] sm:$0xff]
    %v24 = vld [vmem:[#allocation2 + $0x8] sm:$0xff]
    %v25 = vmul.f32 %v23, %v23
    %v26 = vmul.f32 %v24, %v24
    %27 = vadd.xlane.f32.xlu0 %v25
    %v28 = vpop.xlane.xlu0 %27
    %29 = vadd.xlane.f32.xlu0 %v26
    %v30 = vpop.xlane.xlu0 %29
    %v31 = vrsqrt.pop %v28
    %v32 = vrsqrt.pop %v30
    %v33 = vmul.f32 %v23, %v31
    %v34 = vmul.f32 %v24, %v32
    %35 = vst [vmem:[#allocation5] sm:$0xff] %v33
    %36 = vst [vmem:[#allocation5 + $0x8] sm:$0xff] %v34
    // Predicated region
    $region10: #{_lambda_.1} parent=1 // pred_check
      _
    $region11: #{_lambda_.1} parent=1 // pred_check_branch
      %38 = sbr.rel (0) target = $region13
    $region12: #{_lambda_.1} parent=1 // pred_region
      %s40 = ssub.s32 256, 256
      %41 = vsyncadd [#allocation4], %s40
      %s42 = sshll.u32 [#allocation5], 4
      %s43 = int_to_ptr.vmem [resolvable:$true] %s42
      %48 = dma.vmem_to_hbm [thread:$0]  %s43, 256, %s1, [#allocation4], 128, 128, 8
    $region13: #{_lambda_.1} parent=1 // pred_fallthru
      _
    // Predicated region
    $region14: #{_lambda_.1} parent=1 // pred_check
      _
    $region15: #{_lambda_.1} parent=1 // pred_check_branch
      %50 = sbr.rel (0) target = $region17
    $region16: #{_lambda_.1} parent=1 // pred_region
      %51 = dma.done [#allocation4], 256
    $region17: #{_lambda_.1} parent=1 // pred_fallthru
      _
    %52 = vsyncpa [#allocation3], 1
    %53 = vsyncpa [#allocation4], 1

</llo_original>
